<compile_context>
chip_gen: v5e
topology: v5e:2x2
jax: 0.10.0
libtpu: 0.0.40
codegen_flags: <defaults>
</compile_context>

<pallas_src>
import jax
import jax.numpy as jnp
import numpy as np
from jax.experimental import pallas as pl
from jax.experimental.pallas import tpu as pltpu

# ---- config (mirrors `args` of the PyTorch module) -------------------------
MAX_DOC_LENGTH = 16      # L  (Conv1d in_channels)
MAX_QUERY_LENGTH = 8     # Q  (Conv1d length, fc1 in_features)
NFILTERS = 16            # F  (Conv1d out_channels, fc2 width)
LOCAL_FILTER_SIZE = 1    # kernel_size=1 (required for fc1 shapes to line up)
EMB = 32                 # embedding dim contracted by the bmm
BATCH = 2                # number of queries
NDOCS = 4                # clicked docs per query

_HIGHEST = jax.lax.Precision.HIGHEST


def local_model_kernel(c_ref, u_ref, p_ref, out_ref):
    """Single invocation: scores for all N = B*D (query, doc) pairs.

    c_ref  : (N, L, E) bf16  clicked-doc term embeddings
    u_ref  : (N, E)    f32   fc1-reassociated query vector per pair
    p_ref  : (L+F+4, F) f32  packed params:
               rows [0, L)        wc^T          (conv1d weight, k=1)
               rows [L, L+F)      w2^T          (fc2 weight)
               row  L+F           bc*sum(w1)+b1 (fused conv/fc1 bias)
               row  L+F+1         b2
               row  L+F+2         w3
               row  L+F+3         b3 (broadcast across the row)
    out_ref: (1, N)    f32   scores, written once
    """
    N, L, _ = c_ref.shape
    F = p_ref.shape[1]

    c = c_ref[...].astype(jnp.float32)            # (N, L, E)  bf16 -> f32
    u = u_ref[...]                                # (N, E)

    # Interaction + fc1 Q-reduction (reassociated): v[n, l] = <u_n, c[n, l, :]>
    # VPU multiply + XLU lane reduce; no N^2 matmul, no block-diagonal mask.
    v = jnp.sum(c * u[:, None, :], axis=-1)       # (N, L)

    # Static slices of the packed parameter slab (no extra DMAs).
    wct   = p_ref[0:L, :]                         # (L, F)
    w2t   = p_ref[L:L + F, :]                     # (F, F)
    bias1 = p_ref[L + F:L + F + 1, :]             # (1, F)
    b2    = p_ref[L + F + 1:L + F + 2, :]         # (1, F)
    w3    = p_ref[L + F + 2:L + F + 3, :]         # (1, F)
    b3    = p_ref[L + F + 3:L + F + 4, 0:1]       # (1, 1)

    # Conv1d (kernel_size=1) fused with fc1: z = v @ wc^T, then fused bias.
    z = jnp.dot(v, wct, precision=_HIGHEST,
                preferred_element_type=jnp.float32)                      # (N, F)
    m1 = jnp.tanh(z + bias1)                                             # (N, F)

    # fc2 + tanh.
    # TODO(synk): nn.Dropout omitted — inference/eval semantics (identity).
    m2 = jnp.tanh(jnp.dot(m1, w2t, precision=_HIGHEST,
                          preferred_element_type=jnp.float32) + b2)      # (N, F)

    # fc3 + tanh, produced directly as a (1, N) row and stored once.
    s = jnp.tanh(jax.lax.dot_general(w3, m2, (((1,), (1,)), ((), ())),
                                     precision=_HIGHEST,
                                     preferred_element_type=jnp.float32)
                 + b3)                                                   # (1, N)
    out_ref[...] = s


def pack_local_params(params):
    """Pack every (tiny) parameter into one (L+F+4, F) f32 slab -> one DMA.

    Pure layout plumbing over parameters only; in a real serving path this is
    done once at model-load time, not per forward call.
    """
    F, L = params["wc"].shape
    wc = params["wc"].astype(jnp.float32)                          # (F, L)
    w1 = params["w1"].astype(jnp.float32)[:, 0]                    # (Q,)
    bias1 = (params["bc"].astype(jnp.float32)[:, 0] * jnp.sum(w1)
             + params["b1"].astype(jnp.float32)[0, 0])             # (F,)
    rows = [
        wc.T,                                                      # (L, F)
        params["w2"].astype(jnp.float32).T,                        # (F, F)
        bias1[None, :],                                            # (1, F)
        params["b2"].astype(jnp.float32).reshape(1, F),            # (1, F)
        params["w3"].astype(jnp.float32).reshape(1, F),            # (1, F)
        jnp.full((1, F), params["b3"].astype(jnp.float32)[0, 0]),  # (1, F)
    ]
    return jnp.concatenate(rows, axis=0)                           # (L+F+4, F)


def local_model_forward(batch_queries, batch_clicks, params):
    # fc1 reassociation and conv-as-matmul are only valid for kernel_size == 1.
    assert LOCAL_FILTER_SIZE == 1, "LocalModel kernel requires local_filter_size == 1"

    B, D, L, E = batch_clicks.shape
    N = B * D

    # fc1 reassociation (exact): u_n = sum_q w1[q] * query[b(n), q, :].
    # The D-broadcast is a ~1 KB operand at this size (kept 2-D so the kernel
    # needs no in-kernel repeat/relayout); fuses with the einsum under jit.
    w1 = params["w1"].astype(jnp.float32)[:, 0]                          # (Q,)
    u = jnp.einsum("bqe,q->be", batch_queries.astype(jnp.float32), w1,
                   precision=_HIGHEST)                                   # (B, E)
    u_pairs = jnp.broadcast_to(u[:, None, :], (B, D, E)).reshape(N, E)   # (N, E)

    # Largest operand goes to bf16 (halves its DMA); kernel up-casts to f32.
    clicks = batch_clicks.astype(jnp.bfloat16).reshape(N, L, E)          # (N, L, E)

    packed = pack_local_params(params)                                   # (L+F+4, F)

    # No grid: whole problem (< 20 KB) is VMEM resident; no pipeline machinery.
    out = pl.pallas_call(
        local_model_kernel,
        out_shape=jax.ShapeDtypeStruct((1, N), jnp.float32),
        in_specs=[
            pl.BlockSpec(memory_space=pltpu.MemorySpace.VMEM),   # clicks (bf16)
            pl.BlockSpec(memory_space=pltpu.MemorySpace.VMEM),   # u per pair
            pl.BlockSpec(memory_space=pltpu.MemorySpace.VMEM),   # packed params
        ],
        out_specs=pl.BlockSpec(memory_space=pltpu.MemorySpace.VMEM),
    )(clicks, u_pairs, packed)

    return out.reshape(B, D)


def local_model_reference(batch_queries, batch_clicks, params):
    """Pure-JAX reference mirroring the PyTorch forward (no reassociation)."""
    B, D = batch_clicks.shape[:2]
    hp = jax.lax.Precision.HIGHEST
    bq = batch_queries.astype(jnp.float32)
    bc = batch_clicks.astype(jnp.float32)

    qf = jnp.broadcast_to(bq[:, None], (B, D) + bq.shape[1:]).reshape((-1,) + bq.shape[1:])
    cf = bc.reshape((-1,) + bc.shape[2:])                                  # (N, L, E)
    inter = jnp.einsum("nqe,nle->nlq", qf, cf, precision=hp)               # (N, L, Q)

    conv = jnp.einsum("fl,nlq->nfq", params["wc"], inter,
                      precision=hp) + params["bc"][None, :, :]             # (N, F, Q)
    m1 = jnp.tanh(jnp.einsum("nfq,q->nf", conv, params["w1"][:, 0],
                             precision=hp) + params["b1"][0, 0])           # (N, F)
    m2 = jnp.tanh(jnp.matmul(m1, params["w2"].T, precision=hp)
                  + params["b2"][:, 0])                                    # (N, F)
    score = jnp.tanh(jnp.matmul(m2, params["w3"].T, precision=hp)
                     + params["b3"][0, 0])                                 # (N, 1)
    return score.reshape(B, D)


if __name__ == "__main__":
    key = jax.random.PRNGKey(0)
    ks = jax.random.split(key, 10)

    batch_queries = jax.random.normal(ks[0], (BATCH, MAX_QUERY_LENGTH, EMB), jnp.float32)
    batch_clicks = jax.random.normal(ks[1], (BATCH, NDOCS, MAX_DOC_LENGTH, EMB), jnp.float32)

    # Deterministic parameter init (shapes follow the nn.Module __init__).
    params = {
        "wc": 0.1 * jax.random.normal(ks[2], (NFILTERS, MAX_DOC_LENGTH), jnp.float32),
        "bc": 0.1 * jax.random.normal(ks[3], (NFILTERS, 1), jnp.float32),
        "w1": 0.1 * jax.random.normal(ks[4], (MAX_QUERY_LENGTH, 1), jnp.float32),
        "b1": 0.1 * jax.random.normal(ks[5], (1, 1), jnp.float32),
        "w2": 0.1 * jax.random.normal(ks[6], (NFILTERS, NFILTERS), jnp.float32),
        "b2": 0.1 * jax.random.normal(ks[7], (NFILTERS, 1), jnp.float32),
        "w3": 0.1 * jax.random.normal(ks[8], (1, NFILTERS), jnp.float32),
        "b3": 0.1 * jax.random.normal(ks[9], (1, 1), jnp.float32),
    }

    fwd = jax.jit(local_model_forward)
    score = jax.block_until_ready(fwd(batch_queries, batch_clicks, params))
    assert score.shape == (BATCH, NDOCS)

    ref = jax.block_until_ready(local_model_reference(batch_queries, batch_clicks, params))
    # bf16 clicks operand + f32 accumulation vs. HIGHEST-precision f32 reference.
    np.testing.assert_allclose(np.asarray(score), np.asarray(ref), rtol=2e-2, atol=2e-2)

    print("KERNEL_OK")
</pallas_src>

<mosaic_0001>
module attributes {stable_mosaic.version = 11 : i64} {
  func.func @local_model_kernel(%arg0: memref<8x16x32xbf16, #tpu.memory_space<vmem>>, %arg1: memref<8x32xf32, #tpu.memory_space<vmem>>, %arg2: memref<36x16xf32, #tpu.memory_space<vmem>>, %arg3: memref<1x8xf32, #tpu.memory_space<vmem>>) attributes {dimension_semantics = [], scalar_prefetch = 0 : i64, scratch_operands = 0 : i64, tpu.core_type = #tpu.core_type<tc>} {
    %c0 = arith.constant 0 : index
    %c0_0 = arith.constant 0 : index
    %c0_1 = arith.constant 0 : index
    %0 = vector.load %arg0[%c0, %c0_0, %c0_1] : memref<8x16x32xbf16, #tpu.memory_space<vmem>>, vector<8x16x32xbf16>
    %1 = arith.extf %0 : vector<8x16x32xbf16> to vector<8x16x32xf32>
    %c0_2 = arith.constant 0 : index
    %c0_3 = arith.constant 0 : index
    %2 = vector.load %arg1[%c0_2, %c0_3] : memref<8x32xf32, #tpu.memory_space<vmem>>, vector<8x32xf32>
    %3 = vector.shape_cast %2 : vector<8x32xf32> to vector<8x1x32xf32>
    %4 = vector.broadcast %3 : vector<8x1x32xf32> to vector<8x16x32xf32>
    %5 = arith.mulf %1, %4 : vector<8x16x32xf32>
    %cst = arith.constant dense<0.000000e+00> : vector<8x16xf32>
    %6 = vector.multi_reduction <add>, %5, %cst [2] : vector<8x16x32xf32> to vector<8x16xf32>
    %c0_4 = arith.constant 0 : index
    %c0_5 = arith.constant 0 : index
    %7 = vector.load %arg2[%c0_4, %c0_5] : memref<36x16xf32, #tpu.memory_space<vmem>>, vector<16x16xf32>
    %c16 = arith.constant 16 : index
    %c0_6 = arith.constant 0 : index
    %8 = vector.load %arg2[%c16, %c0_6] : memref<36x16xf32, #tpu.memory_space<vmem>>, vector<16x16xf32>
    %c32 = arith.constant 32 : index
    %c0_7 = arith.constant 0 : index
    %9 = vector.load %arg2[%c32, %c0_7] : memref<36x16xf32, #tpu.memory_space<vmem>>, vector<1x16xf32>
    %c33 = arith.constant 33 : index
    %c0_8 = arith.constant 0 : index
    %10 = vector.load %arg2[%c33, %c0_8] : memref<36x16xf32, #tpu.memory_space<vmem>>, vector<1x16xf32>
    %c34 = arith.constant 34 : index
    %c0_9 = arith.constant 0 : index
    %11 = vector.load %arg2[%c34, %c0_9] : memref<36x16xf32, #tpu.memory_space<vmem>>, vector<1x16xf32>
    %c35 = arith.constant 35 : index
    %c0_10 = arith.constant 0 : index
    %12 = vector.load %arg2[%c35, %c0_10] : memref<36x16xf32, #tpu.memory_space<vmem>>, vector<1x1xf32>
    %cst_11 = arith.constant dense<0.000000e+00> : vector<8x16xf32>
    %13 = tpu.matmul %6, %7, %cst_11 {dimension_numbers = #tpu.dot_dimension_numbers<[1], [0], [0], [1], [0, 0, 1, 1], [], []>, precision = #tpu.contract_precision<fp32>} : vector<8x16xf32>, vector<16x16xf32>, vector<8x16xf32> -> vector<8x16xf32>
    %14 = vector.broadcast %9 : vector<1x16xf32> to vector<8x16xf32>
    %15 = arith.addf %13, %14 : vector<8x16xf32>
    %16 = math.tanh %15 : vector<8x16xf32>
    %cst_12 = arith.constant dense<0.000000e+00> : vector<8x16xf32>
    %17 = tpu.matmul %16, %8, %cst_12 {dimension_numbers = #tpu.dot_dimension_numbers<[1], [0], [0], [1], [0, 0, 1, 1], [], []>, precision = #tpu.contract_precision<fp32>} : vector<8x16xf32>, vector<16x16xf32>, vector<8x16xf32> -> vector<8x16xf32>
    %18 = vector.broadcast %10 : vector<1x16xf32> to vector<8x16xf32>
    %19 = arith.addf %17, %18 : vector<8x16xf32>
    %20 = math.tanh %19 : vector<8x16xf32>
    %cst_13 = arith.constant dense<0.000000e+00> : vector<1x8xf32>
    %21 = tpu.matmul %11, %20, %cst_13 {dimension_numbers = #tpu.dot_dimension_numbers<[1], [1], [0], [0], [0, 0, 1, 0], [], []>, precision = #tpu.contract_precision<fp32>} : vector<1x16xf32>, vector<8x16xf32>, vector<1x8xf32> -> vector<1x8xf32>
    %22 = vector.broadcast %12 : vector<1x1xf32> to vector<1x8xf32>
    %23 = arith.addf %21, %22 : vector<1x8xf32>
    %24 = math.tanh %23 : vector<1x8xf32>
    %c0_14 = arith.constant 0 : index
    %c0_15 = arith.constant 0 : index
    %25 = vector.load %arg3[%c0_14, %c0_15] : memref<1x8xf32, #tpu.memory_space<vmem>>, vector<1x8xf32>
    tpu.vector_store %arg3[%c0_14, %c0_15], %24 {strides = array<i32>} : memref<1x8xf32, #tpu.memory_space<vmem>>, vector<1x8xf32>,
    return
  }
}

</mosaic_0001>

<llo_original>
// kernel: local_model_forward.1
$region0: #{local_model_forward.1}
  #allocation0 [shape = 'u32[]', space=smem, size = 0x4, offset = 0x4, fixed_abs, tag = 'smem constant byte address 0x4 - core index']
  #allocation1 [shape = 'u32[72,128]{1,0:T(1,128)}', space=vmem, size = 0x9000, scoped, tag = 'internal scratch']
  %s0 = inlined_call_operand.vmem [shape: bf16[8,16,32], index: 0, kind: input, shape index: {}]
  %s1 = inlined_call_operand.vmem [shape: f32[8,32], index: 1, kind: input, shape index: {}]
  %s2 = inlined_call_operand.vmem [shape: f32[36,16], index: 2, kind: input, shape index: {}]
  %s3 = inlined_call_operand.vmem [shape: f32[1,8], index: 3, kind: output, shape index: {}]
  %s4 = sld [smem:[#allocation0]]
  $region22: #{local_model_forward.1} parent=0
    _
  %s6 = ssub.s32 1, %s4
  %s7 = scalar_select 0, %s6, %s4
  // Predicated region
  $region2: #{local_model_forward.1} parent=0 // pred_check
    _
  $region3: #{local_model_forward.1} parent=0 // pred_check_branch
    %9 = sbr.rel (0) target = $region5
  $region4: #{local_model_forward.1} parent=0 // pred_region
    _
  $region5: #{local_model_forward.1} parent=0 // pred_fallthru
    _
  // Predicated region
  $region6: #{local_model_forward.1} parent=0 // pred_check
    _
  $region7: #{local_model_forward.1} parent=0 // pred_check_branch
    %11 = sbr.rel (0) target = $region9
  $region8: #{local_model_forward.1} parent=0 // pred_region
    _
  $region9: #{local_model_forward.1} parent=0 // pred_fallthru
    _
  // Predicated region
  $region10: #{local_model_forward.1} parent=0 // pred_check
    _
  $region11: #{local_model_forward.1} parent=0 // pred_check_branch
    %13 = sbr.rel (0) target = $region13
  $region12: #{local_model_forward.1} parent=0 // pred_region
    _
  $region13: #{local_model_forward.1} parent=0 // pred_fallthru
    _
  %v14 = vld [vmem:[%s0] sm:$0xf]
  %v15 = vld [vmem:[%s0 + $0x4] sm:$0xf]
  %v16 = vld [vmem:[%s0 + $0x8] sm:$0xf]
  %v17 = vld [vmem:[%s0 + $0xc] sm:$0xf]
  %v18 = vld [vmem:[%s0 + $0x10] sm:$0xf]
  %v19 = vld [vmem:[%s0 + $0x14] sm:$0xf]
  %v20 = vld [vmem:[%s0 + $0x18] sm:$0xf]
  %v21 = vld [vmem:[%s0 + $0x1c] sm:$0xf]
  %v22 = vld [vmem:[%s0 + $0x20] sm:$0xf]
  %v23 = vld [vmem:[%s0 + $0x24] sm:$0xf]
  %v24 = vld [vmem:[%s0 + $0x28] sm:$0xf]
  %v25 = vld [vmem:[%s0 + $0x2c] sm:$0xf]
  %v26 = vld [vmem:[%s0 + $0x30] sm:$0xf]
  %v27 = vld [vmem:[%s0 + $0x34] sm:$0xf]
  %v28 = vld [vmem:[%s0 + $0x38] sm:$0xf]
  %v29 = vld [vmem:[%s0 + $0x3c] sm:$0xf]
  %v30 = vunpack.c.l.bf16 %v14
  %v31 = vunpack.c.l.bf16 %v15
  %v32 = vunpack.c.l.bf16 %v16
  %v33 = vunpack.c.l.bf16 %v17
  %v34 = vunpack.c.l.bf16 %v18
  %v35 = vunpack.c.l.bf16 %v19
  %v36 = vunpack.c.l.bf16 %v20
  %v37 = vunpack.c.l.bf16 %v21
  %v38 = vunpack.c.l.bf16 %v22
  %v39 = vunpack.c.l.bf16 %v23
  %v40 = vunpack.c.l.bf16 %v24
  %v41 = vunpack.c.l.bf16 %v25
  %v42 = vunpack.c.l.bf16 %v26
  %v43 = vunpack.c.l.bf16 %v27
  %v44 = vunpack.c.l.bf16 %v28
  %v45 = vunpack.c.l.bf16 %v29
  %v46 = vld [vmem:[%s1] sm:$0xff]
  %v48 = vrot.slane %v46, 1
  %v49 = vrot.slane %v46, 2
  %v50 = vrot.slane %v46, 3
  %v51 = vrot.slane %v46, 4
  %v52 = vrot.slane %v46, 5
  %v53 = vrot.slane %v46, 6
  %v54 = vrot.slane %v46, 7
  %v55 = vperm.slane %v46, 0
  %v56 = vperm.slane %v48, 0
  %v57 = vperm.slane %v49, 0
  %v58 = vperm.slane %v50, 0
  %v59 = vperm.slane %v51, 0
  %v60 = vperm.slane %v52, 0
  %v61 = vperm.slane %v53, 0
  %v62 = vperm.slane %v54, 0
  %v71 = vmul.f32 %v30, %v55
  %v72 = vmul.f32 %v31, %v55
  %v73 = vmul.f32 %v32, %v56
  %v74 = vmul.f32 %v33, %v56
  %v75 = vmul.f32 %v34, %v57
  %v76 = vmul.f32 %v35, %v57
  %v77 = vmul.f32 %v36, %v58
  %v78 = vmul.f32 %v37, %v58
  %v79 = vmul.f32 %v38, %v59
  %v80 = vmul.f32 %v39, %v59
  %v81 = vmul.f32 %v40, %v60
  %v82 = vmul.f32 %v41, %v60
  %v83 = vmul.f32 %v42, %v61
  %v84 = vmul.f32 %v43, %v61
  %v85 = vmul.f32 %v44, %v62
  %v86 = vmul.f32 %v45, %v62
  %vm87 = vcmask 261120
  %v88 = vsel %vm87, %v71, 0.0
  %89 = vadd.xlane.f32.xlu0 %v88
  %v90 = vpop.xlane.xlu0 %89
  %v91 = vsel %vm87, %v72, 0.0
  %92 = vadd.xlane.f32.xlu0 %v91
  %v93 = vpop.xlane.xlu0 %92
  %v94 = vsel %vm87, %v73, 0.0
  %95 = vadd.xlane.f32.xlu0 %v94
  %v96 = vpop.xlane.xlu0 %95
  %v97 = vsel %vm87, %v74, 0.0
  %98 = vadd.xlane.f32.xlu0 %v97
  %v99 = vpop.xlane.xlu0 %98
  %v100 = vsel %vm87, %v75, 0.0
  %101 = vadd.xlane.f32.xlu0 %v100
  %v102 = vpop.xlane.xlu0 %101
  %v103 = vsel %vm87, %v76, 0.0
  %104 = vadd.xlane.f32.xlu0 %v103
  %v105 = vpop.xlane.xlu0 %104
  %v106 = vsel %vm87, %v77, 0.0
  %107 = vadd.xlane.f32.xlu0 %v106
  %v108 = vpop.xlane.xlu0 %107
  %v109 = vsel %vm87, %v78, 0.0
  %110 = vadd.xlane.f32.xlu0 %v109
  %v111 = vpop.xlane.xlu0 %110
  %v112 = vsel %vm87, %v79, 0.0
  %113 = vadd.xlane.f32.xlu0 %v112
  %v114 = vpop.xlane.xlu0 %113
  %v115 = vsel %vm87, %v80, 0.0
  %116 = vadd.xlane.f32.xlu0 %v115
  %v117 = vpop.xlane.xlu0 %116
  %v118 = vsel %vm87, %v81, 0.0
  %119 = vadd.xlane.f32.xlu0 %v118
  %v120 = vpop.xlane.xlu0 %119
  %v121 = vsel %vm87, %v82, 0.0
  %122 = vadd.xlane.f32.xlu0 %v121
  %v123 = vpop.xlane.xlu0 %122
  %v124 = vsel %vm87, %v83, 0.0
  %125 = vadd.xlane.f32.xlu0 %v124
  %v126 = vpop.xlane.xlu0 %125
  %v127 = vsel %vm87, %v84, 0.0
  %128 = vadd.xlane.f32.xlu0 %v127
  %v129 = vpop.xlane.xlu0 %128
  %v130 = vsel %vm87, %v85, 0.0
  %131 = vadd.xlane.f32.xlu0 %v130
  %v132 = vpop.xlane.xlu0 %131
  %v133 = vsel %vm87, %v86, 0.0
  %134 = vadd.xlane.f32.xlu0 %v133
  %v135 = vpop.xlane.xlu0 %134
  %v136 = vld [vmem:[%s2] sm:$0xff]
  %v137 = vld [vmem:[%s2 + $0x8] sm:$0xff]
  %v138 = vld [vmem:[%s2 + $0x10] sm:$0xff]
  %v139 = vld [vmem:[%s2 + $0x18] sm:$0xff]
  %v140 = vld [vmem:[%s2 + $0x20] sm:$0x1]
  %v141 = vld [vmem:[%s2 + $0x21] sm:$0x1]
  %v142 = vld [vmem:[%s2 + $0x22] sm:$0x1]
  %v143 = vld [vmem:[%s2 + $0x23] sm:$0x1]
  %v144 = vperm.slane %v140, 0
  %v161 = vlaneseq
  %v162 = vand.u32 %v161, 127
  %v163 = vperm.slane %v90, %v162
  %v164 = vadd.s32 %v162, 4294967288
  %v165 = vperm.slane %v93, %v164
  %vm166 = vcmask 130112
  %v167 = vsel %vm166, %v165, %v163
  %v168 = vperm.slane %v96, %v162
  %v169 = vperm.slane %v99, %v164
  %v170 = vsel %vm166, %v169, %v168
  %v171 = vperm.slane %v102, %v162
  %v172 = vperm.slane %v105, %v164
  %v173 = vsel %vm166, %v172, %v171
  %v174 = vperm.slane %v108, %v162
  %v175 = vperm.slane %v111, %v164
  %v176 = vsel %vm166, %v175, %v174
  %v177 = vperm.slane %v114, %v162
  %v178 = vperm.slane %v117, %v164
  %v179 = vsel %vm166, %v178, %v177
  %v180 = vperm.slane %v120, %v162
  %v181 = vperm.slane %v123, %v164
  %v182 = vsel %vm166, %v181, %v180
  %v183 = vperm.slane %v126, %v162
  %v184 = vperm.slane %v129, %v164
  %v185 = vsel %vm166, %v184, %v183
  %v186 = vperm.slane %v132, %v162
  %v187 = vperm.slane %v135, %v164
  %v188 = vsel %vm166, %v187, %v186
  %vm189 = vcmask 1041409
  %v190 = vsel %vm189, %v170, %v167
  %vm191 = vcmask 1042434
  %v192 = vsel %vm191, %v173, %v190
  %vm193 = vcmask 1043459
  %v194 = vsel %vm193, %v176, %v192
  %vm195 = vcmask 1044484
  %v196 = vsel %vm195, %v179, %v194
  %vm197 = vcmask 1045509
  %v198 = vsel %vm197, %v182, %v196
  %vm199 = vcmask 1046534
  %v200 = vsel %vm199, %v185, %v198
  %vm201 = vcmask 1047559
  %v202 = vsel %vm201, %v188, %v200
  %vm203 = vcmask 130048
  %v204 = vsel %vm203, %v202, 0
  %206 = vmatpush.msra.mxu0 0.0
  %207 = vmatpush.msra.mxu0 0.0
  %208 = vmatpush.msra.mxu0 0.0
  %209 = vmatpush.msra.mxu0 0.0
  %210 = vmatpush.msra.mxu0 0.0
  %211 = vmatpush.msra.mxu0 0.0
  %212 = vmatpush.msra.mxu0 0.0
  %213 = vmatpush.msra.mxu0 0.0
  %214 = vmatpush.msra.mxu0 0.0
  %215 = vmatpush.msra.mxu0 0.0
  %216 = vmatpush.msra.mxu0 0.0
  %217 = vmatpush.msra.mxu0 0.0
  %218 = vmatpush.msra.mxu0 0.0
  %219 = vmatpush.msra.mxu0 0.0
  %v220 = vand.u32 %v137, 4294901760
  %221 = vmatpush.msra.mxu0 %v220
  %v222 = vand.u32 %v136, 4294901760
  %223 = vmatpush.msra.mxu0 %v222
  %v224 = vand.u32 %v204, 4294901760
  %v225 = vsub.f32 %v204, %v224
  %v226 = vand.u32 %v225, 4294901760
  %v227 = vsub.f32 %v225, %v226
  %v228 = vand.u32 %v227, 4294901760
  %229 = vmatmul.f32.gmra.mxu0 %v228
  %v230 = vpop.f32.mrf.mxu0
  %v231 = vadd.f32 %v144, %v230
  %232 = vdwg.mxu0
  %233 = vmatpush.msra.mxu0 0.0
  %234 = vmatpush.msra.mxu0 0.0
  %235 = vmatpush.msra.mxu0 0.0
  %236 = vmatpush.msra.mxu0 0.0
  %237 = vmatpush.msra.mxu0 0.0
  %238 = vmatpush.msra.mxu0 0.0
  %239 = vmatpush.msra.mxu0 0.0
  %240 = vmatpush.msra.mxu0 0.0
  %241 = vmatpush.msra.mxu0 0.0
  %242 = vmatpush.msra.mxu0 0.0
  %243 = vmatpush.msra.mxu0 0.0
  %244 = vmatpush.msra.mxu0 0.0
  %245 = vmatpush.msra.mxu0 0.0
  %246 = vmatpush.msra.mxu0 0.0
  %v247 = vand.u32 %v137, 4294901760
  %v248 = vsub.f32 %v137, %v247
  %v249 = vand.u32 %v248, 4294901760
  %v250 = vsub.f32 %v248, %v249
  %v251 = vand.u32 %v250, 4294901760
  %252 = vmatpush.msra.mxu0 %v251
  %v253 = vand.u32 %v136, 4294901760
  %v254 = vsub.f32 %v136, %v253
  %v255 = vand.u32 %v254, 4294901760
  %v256 = vsub.f32 %v254, %v255
  %v257 = vand.u32 %v256, 4294901760
  %258 = vmatpush.msra.mxu0 %v257
  %v259 = vand.u32 %v204, 4294901760
  %260 = vmatmul.f32.gmra.mxu0 %v259
  %v261 = vpop.f32.mrf.mxu0
  %v262 = vadd.f32 %v231, %v261
  %263 = vdwg.mxu0
  %264 = vmatpush.msra.mxu0 0.0
  %265 = vmatpush.msra.mxu0 0.0
  %266 = vmatpush.msra.mxu0 0.0
  %267 = vmatpush.msra.mxu0 0.0
  %268 = vmatpush.msra.mxu0 0.0
  %269 = vmatpush.msra.mxu0 0.0
  %270 = vmatpush.msra.mxu0 0.0
  %271 = vmatpush.msra.mxu0 0.0
  %272 = vmatpush.msra.mxu0 0.0
  %273 = vmatpush.msra.mxu0 0.0
  %274 = vmatpush.msra.mxu0 0.0
  %275 = vmatpush.msra.mxu0 0.0
  %276 = vmatpush.msra.mxu0 0.0
  %277 = vmatpush.msra.mxu0 0.0
  %v278 = vand.u32 %v137, 4294901760
  %v279 = vsub.f32 %v137, %v278
  %280 = vmatpush.msra.mxu0 %v279
  %v281 = vand.u32 %v136, 4294901760
  %v282 = vsub.f32 %v136, %v281
  %283 = vmatpush.msra.mxu0 %v282
  %v284 = vand.u32 %v204, 4294901760
  %v285 = vsub.f32 %v204, %v284
  %286 = vmatmul.f32.gmra.mxu0 %v285
  %v287 = vpop.f32.mrf.mxu0
  %v288 = vadd.f32 %v262, %v287
  %289 = vdwg.mxu0
  %290 = vmatpush.msra.mxu0 0.0
  %291 = vmatpush.msra.mxu0 0.0
  %292 = vmatpush.msra.mxu0 0.0
  %293 = vmatpush.msra.mxu0 0.0
  %294 = vmatpush.msra.mxu0 0.0
  %295 = vmatpush.msra.mxu0 0.0
  %296 = vmatpush.msra.mxu0 0.0
  %297 = vmatpush.msra.mxu0 0.0
  %298 = vmatpush.msra.mxu0 0.0
  %299 = vmatpush.msra.mxu0 0.0
  %300 = vmatpush.msra.mxu0 0.0
  %301 = vmatpush.msra.mxu0 0.0
  %302 = vmatpush.msra.mxu0 0.0
  %303 = vmatpush.msra.mxu0 0.0
  %v304 = vand.u32 %v137, 4294901760
  %305 = vmatpush.msra.mxu0 %v304
  %v306 = vand.u32 %v136, 4294901760
  %307 = vmatpush.msra.mxu0 %v306
  %v308 = vand.u32 %v204, 4294901760
  %v309 = vsub.f32 %v204, %v308
  %v310 = vand.u32 %v309, 4294901760
  %311 = vmatmul.f32.gmra.mxu0 %v310
  %v312 = vpop.f32.mrf.mxu0
  %v313 = vadd.f32 %v288, %v312
  %314 = vdwg.mxu0
  %315 = vmatpush.msra.mxu0 0.0
  %316 = vmatpush.msra.mxu0 0.0
  %317 = vmatpush.msra.mxu0 0.0
  %318 = vmatpush.msra.mxu0 0.0
  %319 = vmatpush.msra.mxu0 0.0
  %320 = vmatpush.msra.mxu0 0.0
  %321 = vmatpush.msra.mxu0 0.0
  %322 = vmatpush.msra.mxu0 0.0
  %323 = vmatpush.msra.mxu0 0.0
  %324 = vmatpush.msra.mxu0 0.0
  %325 = vmatpush.msra.mxu0 0.0
  %326 = vmatpush.msra.mxu0 0.0
  %327 = vmatpush.msra.mxu0 0.0
  %328 = vmatpush.msra.mxu0 0.0
  %v329 = vand.u32 %v137, 4294901760
  %v330 = vsub.f32 %v137, %v329
  %v331 = vand.u32 %v330, 4294901760
  %332 = vmatpush.msra.mxu0 %v331
  %v333 = vand.u32 %v136, 4294901760
  %v334 = vsub.f32 %v136, %v333
  %v335 = vand.u32 %v334, 4294901760
  %336 = vmatpush.msra.mxu0 %v335
  %v337 = vand.u32 %v204, 4294901760
  %338 = vmatmul.f32.gmra.mxu0 %v337
  %v339 = vpop.f32.mrf.mxu0
  %v340 = vadd.f32 %v313, %v339
  %341 = vdwg.mxu0
  %342 = vmatpush.msra.mxu0 0.0
  %343 = vmatpush.msra.mxu0 0.0
  %344 = vmatpush.msra.mxu0 0.0
  %345 = vmatpush.msra.mxu0 0.0
  %346 = vmatpush.msra.mxu0 0.0
  %347 = vmatpush.msra.mxu0 0.0
  %348 = vmatpush.msra.mxu0 0.0
  %349 = vmatpush.msra.mxu0 0.0
  %350 = vmatpush.msra.mxu0 0.0
  %351 = vmatpush.msra.mxu0 0.0
  %352 = vmatpush.msra.mxu0 0.0
  %353 = vmatpush.msra.mxu0 0.0
  %354 = vmatpush.msra.mxu0 0.0
  %355 = vmatpush.msra.mxu0 0.0
  %v356 = vand.u32 %v137, 4294901760
  %357 = vmatpush.msra.mxu0 %v356
  %v358 = vand.u32 %v136, 4294901760
  %359 = vmatpush.msra.mxu0 %v358
  %v360 = vand.u32 %v204, 4294901760
  %361 = vmatmul.f32.gmra.mxu0 %v360
  %v362 = vpop.f32.mrf.mxu0
  %v363 = vadd.f32 %v340, %v362
  %364 = vdwg.mxu0
  %v365 = vtanh.pop %v363
  %v366 = vperm.slane %v141, 0
  %v368 = vsel %vm203, %v365, 0
  %370 = vmatpush.msra.mxu0 0.0
  %371 = vmatpush.msra.mxu0 0.0
  %372 = vmatpush.msra.mxu0 0.0
  %373 = vmatpush.msra.mxu0 0.0
  %374 = vmatpush.msra.mxu0 0.0
  %375 = vmatpush.msra.mxu0 0.0
  %376 = vmatpush.msra.mxu0 0.0
  %377 = vmatpush.msra.mxu0 0.0
  %378 = vmatpush.msra.mxu0 0.0
  %379 = vmatpush.msra.mxu0 0.0
  %380 = vmatpush.msra.mxu0 0.0
  %381 = vmatpush.msra.mxu0 0.0
  %382 = vmatpush.msra.mxu0 0.0
  %383 = vmatpush.msra.mxu0 0.0
  %v384 = vand.u32 %v139, 4294901760
  %385 = vmatpush.msra.mxu0 %v384
  %v386 = vand.u32 %v138, 4294901760
  %387 = vmatpush.msra.mxu0 %v386
  %v388 = vand.u32 %v368, 4294901760
  %v389 = vsub.f32 %v368, %v388
  %v390 = vand.u32 %v389, 4294901760
  %v391 = vsub.f32 %v389, %v390
  %v392 = vand.u32 %v391, 4294901760
  %393 = vmatmul.f32.gmra.mxu0 %v392
  %v394 = vpop.f32.mrf.mxu0
  %v395 = vadd.f32 %v366, %v394
  %396 = vdwg.mxu0
  %397 = vmatpush.msra.mxu0 0.0
  %398 = vmatpush.msra.mxu0 0.0
  %399 = vmatpush.msra.mxu0 0.0
  %400 = vmatpush.msra.mxu0 0.0
  %401 = vmatpush.msra.mxu0 0.0
  %402 = vmatpush.msra.mxu0 0.0
  %403 = vmatpush.msra.mxu0 0.0
  %404 = vmatpush.msra.mxu0 0.0
  %405 = vmatpush.msra.mxu0 0.0
  %406 = vmatpush.msra.mxu0 0.0
  %407 = vmatpush.msra.mxu0 0.0
  %408 = vmatpush.msra.mxu0 0.0
  %409 = vmatpush.msra.mxu0 0.0
  %410 = vmatpush.msra.mxu0 0.0
  %v411 = vand.u32 %v139, 4294901760
  %v412 = vsub.f32 %v139, %v411
  %v413 = vand.u32 %v412, 4294901760
  %v414 = vsub.f32 %v412, %v413
  %v415 = vand.u32 %v414, 4294901760
  %416 = vmatpush.msra.mxu0 %v415
  %v417 = vand.u32 %v138, 4294901760
  %v418 = vsub.f32 %v138, %v417
  %v419 = vand.u32 %v418, 4294901760
  %v420 = vsub.f32 %v418, %v419
  %v421 = vand.u32 %v420, 4294901760
  %422 = vmatpush.msra.mxu0 %v421
  %v423 = vand.u32 %v368, 4294901760
  %424 = vmatmul.f32.gmra.mxu0 %v423
  %v425 = vpop.f32.mrf.mxu0
  %v426 = vadd.f32 %v395, %v425
  %427 = vdwg.mxu0
  %428 = vmatpush.msra.mxu0 0.0
  %429 = vmatpush.msra.mxu0 0.0
  %430 = vmatpush.msra.mxu0 0.0
  %431 = vmatpush.msra.mxu0 0.0
  %432 = vmatpush.msra.mxu0 0.0
  %433 = vmatpush.msra.mxu0 0.0
  %434 = vmatpush.msra.mxu0 0.0
  %435 = vmatpush.msra.mxu0 0.0
  %436 = vmatpush.msra.mxu0 0.0
  %437 = vmatpush.msra.mxu0 0.0
  %438 = vmatpush.msra.mxu0 0.0
  %439 = vmatpush.msra.mxu0 0.0
  %440 = vmatpush.msra.mxu0 0.0
  %441 = vmatpush.msra.mxu0 0.0
  %v442 = vand.u32 %v139, 4294901760
  %v443 = vsub.f32 %v139, %v442
  %444 = vmatpush.msra.mxu0 %v443
  %v445 = vand.u32 %v138, 4294901760
  %v446 = vsub.f32 %v138, %v445
  %447 = vmatpush.msra.mxu0 %v446
  %v448 = vand.u32 %v368, 4294901760
  %v449 = vsub.f32 %v368, %v448
  %450 = vmatmul.f32.gmra.mxu0 %v449
  %v451 = vpop.f32.mrf.mxu0
  %v452 = vadd.f32 %v426, %v451
  %453 = vdwg.mxu0
  %454 = vmatpush.msra.mxu0 0.0
  %455 = vmatpush.msra.mxu0 0.0
  %456 = vmatpush.msra.mxu0 0.0
  %457 = vmatpush.msra.mxu0 0.0
  %458 = vmatpush.msra.mxu0 0.0
  %459 = vmatpush.msra.mxu0 0.0
  %460 = vmatpush.msra.mxu0 0.0
  %461 = vmatpush.msra.mxu0 0.0
  %462 = vmatpush.msra.mxu0 0.0
  %463 = vmatpush.msra.mxu0 0.0
  %464 = vmatpush.msra.mxu0 0.0
  %465 = vmatpush.msra.mxu0 0.0
  %466 = vmatpush.msra.mxu0 0.0
  %467 = vmatpush.msra.mxu0 0.0
  %v468 = vand.u32 %v139, 4294901760
  %469 = vmatpush.msra.mxu0 %v468
  %v470 = vand.u32 %v138, 4294901760
  %471 = vmatpush.msra.mxu0 %v470
  %v472 = vand.u32 %v368, 4294901760
  %v473 = vsub.f32 %v368, %v472
  %v474 = vand.u32 %v473, 4294901760
  %475 = vmatmul.f32.gmra.mxu0 %v474
  %v476 = vpop.f32.mrf.mxu0
  %v477 = vadd.f32 %v452, %v476
  %478 = vdwg.mxu0
  %479 = vmatpush.msra.mxu0 0.0
  %480 = vmatpush.msra.mxu0 0.0
  %481 = vmatpush.msra.mxu0 0.0
  %482 = vmatpush.msra.mxu0 0.0
  %483 = vmatpush.msra.mxu0 0.0
  %484 = vmatpush.msra.mxu0 0.0
  %485 = vmatpush.msra.mxu0 0.0
  %486 = vmatpush.msra.mxu0 0.0
  %487 = vmatpush.msra.mxu0 0.0
  %488 = vmatpush.msra.mxu0 0.0
  %489 = vmatpush.msra.mxu0 0.0
  %490 = vmatpush.msra.mxu0 0.0
  %491 = vmatpush.msra.mxu0 0.0
  %492 = vmatpush.msra.mxu0 0.0
  %v493 = vand.u32 %v139, 4294901760
  %v494 = vsub.f32 %v139, %v493
  %v495 = vand.u32 %v494, 4294901760
  %496 = vmatpush.msra.mxu0 %v495
  %v497 = vand.u32 %v138, 4294901760
  %v498 = vsub.f32 %v138, %v497
  %v499 = vand.u32 %v498, 4294901760
  %500 = vmatpush.msra.mxu0 %v499
  %v501 = vand.u32 %v368, 4294901760
  %502 = vmatmul.f32.gmra.mxu0 %v501
  %v503 = vpop.f32.mrf.mxu0
  %v504 = vadd.f32 %v477, %v503
  %505 = vdwg.mxu0
  %506 = vmatpush.msra.mxu0 0.0
  %507 = vmatpush.msra.mxu0 0.0
  %508 = vmatpush.msra.mxu0 0.0
  %509 = vmatpush.msra.mxu0 0.0
  %510 = vmatpush.msra.mxu0 0.0
  %511 = vmatpush.msra.mxu0 0.0
  %512 = vmatpush.msra.mxu0 0.0
  %513 = vmatpush.msra.mxu0 0.0
  %514 = vmatpush.msra.mxu0 0.0
  %515 = vmatpush.msra.mxu0 0.0
  %516 = vmatpush.msra.mxu0 0.0
  %517 = vmatpush.msra.mxu0 0.0
  %518 = vmatpush.msra.mxu0 0.0
  %519 = vmatpush.msra.mxu0 0.0
  %v520 = vand.u32 %v139, 4294901760
  %521 = vmatpush.msra.mxu0 %v520
  %v522 = vand.u32 %v138, 4294901760
  %523 = vmatpush.msra.mxu0 %v522
  %v524 = vand.u32 %v368, 4294901760
  %525 = vmatmul.f32.gmra.mxu0 %v524
  %v526 = vpop.f32.mrf.mxu0
  %v527 = vadd.f32 %v504, %v526
  %528 = vdwg.mxu0
  %v529 = vtanh.pop %v527
  %531 = vset.pattern.permute.xlu0 0
  %532 = vperm.xlu0 %531, %v143
  %v533 = vpop.permute.xlu0 %532
  %v536 = vsel %vm203, %v142, 0
  %v539 = vsel %vm203, %v529, 0
  %541 = vmatpush.xpose.msra.mxu0 0.0
  %542 = vmatpush.xpose.msra.mxu0 0.0
  %543 = vmatpush.xpose.msra.mxu0 0.0
  %544 = vmatpush.xpose.msra.mxu0 0.0
  %545 = vmatpush.xpose.msra.mxu0 0.0
  %546 = vmatpush.xpose.msra.mxu0 0.0
  %547 = vmatpush.xpose.msra.mxu0 0.0
  %548 = vmatpush.xpose.msra.mxu0 0.0
  %549 = vmatpush.xpose.msra.mxu0 0.0
  %550 = vmatpush.xpose.msra.mxu0 0.0
  %551 = vmatpush.xpose.msra.mxu0 0.0
  %552 = vmatpush.xpose.msra.mxu0 0.0
  %553 = vmatpush.xpose.msra.mxu0 0.0
  %554 = vmatpush.xpose.msra.mxu0 0.0
  %555 = vmatpush.xpose.msra.mxu0 0.0
  %v556 = vand.u32 %v539, 4294901760
  %557 = vmatpush.xpose.msra.mxu0 %v556
  %v558 = vand.u32 %v536, 4294901760
  %v559 = vsub.f32 %v536, %v558
  %v560 = vand.u32 %v559, 4294901760
  %v561 = vsub.f32 %v559, %v560
  %v562 = vand.u32 %v561, 4294901760
  %563 = vmatmul.f32.gmra.mxu0 %v562
  %v564 = vpop.f32.mrf.mxu0
  %v565 = vadd.f32 %v533, %v564
  %566 = vdwg.mxu0
  %567 = vmatpush.xpose.msra.mxu0 0.0
  %568 = vmatpush.xpose.msra.mxu0 0.0
  %569 = vmatpush.xpose.msra.mxu0 0.0
  %570 = vmatpush.xpose.msra.mxu0 0.0
  %571 = vmatpush.xpose.msra.mxu0 0.0
  %572 = vmatpush.xpose.msra.mxu0 0.0
  %573 = vmatpush.xpose.msra.mxu0 0.0
  %574 = vmatpush.xpose.msra.mxu0 0.0
  %575 = vmatpush.xpose.msra.mxu0 0.0
  %576 = vmatpush.xpose.msra.mxu0 0.0
  %577 = vmatpush.xpose.msra.mxu0 0.0
  %578 = vmatpush.xpose.msra.mxu0 0.0
  %579 = vmatpush.xpose.msra.mxu0 0.0
  %580 = vmatpush.xpose.msra.mxu0 0.0
  %581 = vmatpush.xpose.msra.mxu0 0.0
  %v582 = vand.u32 %v539, 4294901760
  %v583 = vsub.f32 %v539, %v582
  %v584 = vand.u32 %v583, 4294901760
  %v585 = vsub.f32 %v583, %v584
  %v586 = vand.u32 %v585, 4294901760
  %587 = vmatpush.xpose.msra.mxu0 %v586
  %v588 = vand.u32 %v536, 4294901760
  %589 = vmatmul.f32.gmra.mxu0 %v588
  %v590 = vpop.f32.mrf.mxu0
  %v591 = vadd.f32 %v565, %v590
  %592 = vdwg.mxu0
  %593 = vmatpush.xpose.msra.mxu0 0.0
  %594 = vmatpush.xpose.msra.mxu0 0.0
  %595 = vmatpush.xpose.msra.mxu0 0.0
  %596 = vmatpush.xpose.msra.mxu0 0.0
  %597 = vmatpush.xpose.msra.mxu0 0.0
  %598 = vmatpush.xpose.msra.mxu0 0.0
  %599 = vmatpush.xpose.msra.mxu0 0.0
  %600 = vmatpush.xpose.msra.mxu0 0.0
  %601 = vmatpush.xpose.msra.mxu0 0.0
  %602 = vmatpush.xpose.msra.mxu0 0.0
  %603 = vmatpush.xpose.msra.mxu0 0.0
  %604 = vmatpush.xpose.msra.mxu0 0.0
  %605 = vmatpush.xpose.msra.mxu0 0.0
  %606 = vmatpush.xpose.msra.mxu0 0.0
  %607 = vmatpush.xpose.msra.mxu0 0.0
  %v608 = vand.u32 %v539, 4294901760
  %v609 = vsub.f32 %v539, %v608
  %610 = vmatpush.xpose.msra.mxu0 %v609
  %v611 = vand.u32 %v536, 4294901760
  %v612 = vsub.f32 %v536, %v611
  %613 = vmatmul.f32.gmra.mxu0 %v612
  %v614 = vpop.f32.mrf.mxu0
  %v615 = vadd.f32 %v591, %v614
  %616 = vdwg.mxu0
  %617 = vmatpush.xpose.msra.mxu0 0.0
  %618 = vmatpush.xpose.msra.mxu0 0.0
  %619 = vmatpush.xpose.msra.mxu0 0.0
  %620 = vmatpush.xpose.msra.mxu0 0.0
  %621 = vmatpush.xpose.msra.mxu0 0.0
  %622 = vmatpush.xpose.msra.mxu0 0.0
  %623 = vmatpush.xpose.msra.mxu0 0.0
  %624 = vmatpush.xpose.msra.mxu0 0.0
  %625 = vmatpush.xpose.msra.mxu0 0.0
  %626 = vmatpush.xpose.msra.mxu0 0.0
  %627 = vmatpush.xpose.msra.mxu0 0.0
  %628 = vmatpush.xpose.msra.mxu0 0.0
  %629 = vmatpush.xpose.msra.mxu0 0.0
  %630 = vmatpush.xpose.msra.mxu0 0.0
  %631 = vmatpush.xpose.msra.mxu0 0.0
  %v632 = vand.u32 %v539, 4294901760
  %633 = vmatpush.xpose.msra.mxu0 %v632
  %v634 = vand.u32 %v536, 4294901760
  %v635 = vsub.f32 %v536, %v634
  %v636 = vand.u32 %v635, 4294901760
  %637 = vmatmul.f32.gmra.mxu0 %v636
  %v638 = vpop.f32.mrf.mxu0
  %v639 = vadd.f32 %v615, %v638
  %640 = vdwg.mxu0
  %641 = vmatpush.xpose.msra.mxu0 0.0
  %642 = vmatpush.xpose.msra.mxu0 0.0
  %643 = vmatpush.xpose.msra.mxu0 0.0
  %644 = vmatpush.xpose.msra.mxu0 0.0
  %645 = vmatpush.xpose.msra.mxu0 0.0
  %646 = vmatpush.xpose.msra.mxu0 0.0
  %647 = vmatpush.xpose.msra.mxu0 0.0
  %648 = vmatpush.xpose.msra.mxu0 0.0
  %649 = vmatpush.xpose.msra.mxu0 0.0
  %650 = vmatpush.xpose.msra.mxu0 0.0
  %651 = vmatpush.xpose.msra.mxu0 0.0
  %652 = vmatpush.xpose.msra.mxu0 0.0
  %653 = vmatpush.xpose.msra.mxu0 0.0
  %654 = vmatpush.xpose.msra.mxu0 0.0
  %655 = vmatpush.xpose.msra.mxu0 0.0
  %v656 = vand.u32 %v539, 4294901760
  %v657 = vsub.f32 %v539, %v656
  %v658 = vand.u32 %v657, 4294901760
  %659 = vmatpush.xpose.msra.mxu0 %v658
  %v660 = vand.u32 %v536, 4294901760
  %661 = vmatmul.f32.gmra.mxu0 %v660
  %v662 = vpop.f32.mrf.mxu0
  %v663 = vadd.f32 %v639, %v662
  %664 = vdwg.mxu0
  %665 = vmatpush.xpose.msra.mxu0 0.0
  %666 = vmatpush.xpose.msra.mxu0 0.0
  %667 = vmatpush.xpose.msra.mxu0 0.0
  %668 = vmatpush.xpose.msra.mxu0 0.0
  %669 = vmatpush.xpose.msra.mxu0 0.0
  %670 = vmatpush.xpose.msra.mxu0 0.0
  %671 = vmatpush.xpose.msra.mxu0 0.0
  %672 = vmatpush.xpose.msra.mxu0 0.0
  %673 = vmatpush.xpose.msra.mxu0 0.0
  %674 = vmatpush.xpose.msra.mxu0 0.0
  %675 = vmatpush.xpose.msra.mxu0 0.0
  %676 = vmatpush.xpose.msra.mxu0 0.0
  %677 = vmatpush.xpose.msra.mxu0 0.0
  %678 = vmatpush.xpose.msra.mxu0 0.0
  %679 = vmatpush.xpose.msra.mxu0 0.0
  %v680 = vand.u32 %v539, 4294901760
  %681 = vmatpush.xpose.msra.mxu0 %v680
  %v682 = vand.u32 %v536, 4294901760
  %683 = vmatmul.f32.gmra.mxu0 %v682
  %v684 = vpop.f32.mrf.mxu0
  %v685 = vadd.f32 %v663, %v684
  %686 = vdwg.mxu0
  %v687 = vtanh.pop %v685
  %vm688 = vcmask 57344
  %689 = vst.msk [vmem:[%s3] sm:$0x1] %vm688, %v687
  // Predicated region
  $region14: #{local_model_forward.1} parent=0 // pred_check
    _
  $region15: #{local_model_forward.1} parent=0 // pred_check_branch
    %691 = sbr.rel (0) target = $region17
  $region16: #{local_model_forward.1} parent=0 // pred_region
    _
  $region17: #{local_model_forward.1} parent=0 // pred_fallthru
    _
  // Predicated region
  $region18: #{local_model_forward.1} parent=0 // pred_check
    _
  $region19: #{local_model_forward.1} parent=0 // pred_check_branch
    %693 = sbr.rel (0) target = $region21
  $region20: #{local_model_forward.1} parent=0 // pred_region
    _
  $region21: #{local_model_forward.1} parent=0 // pred_fallthru
    _

</llo_original>
